<compile_context>
chip_gen: v5e
topology: v5e:2x2
jax: 0.10.0
libtpu: 0.0.40
codegen_flags: <defaults>
</compile_context>

<pallas_src>
import functools
import math

import jax
import jax.numpy as jnp
from jax.experimental import pallas as pl
from jax.experimental.pallas import tpu as pltpu


def _expand_ln_kernel(x_ref, wc_ref, red_ref, gb_ref, beta_ref, o_ref, *,
                      inv_dim, eps):
    """One grid step = (row tile of tokens) x (one p1 strip of the weight).

    x_ref   : (tm, dim)         bf16  token rows, tm = n_bh * W
    wc_ref  : (p, dim, p*dim)   bf16  mean-centered expand weight strips (resident)
    red_ref : (p*dim, p)        bf16  per-p2-group ones (reduction matrix)
    gb_ref  : (p, p*dim)        bf16  per-p2-group broadcast of LN gamma
    beta_ref: (1, p*dim)        f32   LN beta tiled across the p2 groups
    o_ref   : (n_bh, 1, W, p*dim)     output tile (bf16)
    """
    j = pl.program_id(1)                      # p1 strip index (dynamic, leading-dim)
    x = x_ref[...]                            # (tm, dim) bf16
    w = wc_ref[j]                             # (dim, p*dim) bf16, pre-centered

    # Main expand matmul (bf16 MXU, f32 accumulation).  Weight columns are
    # centered per LayerNorm group, so yc is already (y - mean_group).
    yc = jnp.dot(x, w, preferred_element_type=jnp.float32)        # (tm, p*dim)

    # Per-group variance: one bf16 MXU reduction of yc^2 (centered -> no
    # E[y^2]-mean^2 cancellation).
    yc2 = (yc * yc).astype(jnp.bfloat16)
    ssq = jnp.dot(yc2, red_ref[...], preferred_element_type=jnp.float32)  # (tm, p)
    rstd = jax.lax.rsqrt(ssq * inv_dim + eps)                     # (tm, p)

    # Broadcast rstd back to full width with gamma folded in (tiny bf16
    # matmul, K = p), then a single FMA epilogue and a bf16 store.
    a_full = jnp.dot(rstd.astype(jnp.bfloat16), gb_ref[...],
                     preferred_element_type=jnp.float32)          # (tm, p*dim)
    out = yc * a_full + beta_ref[...]
    o_ref[...] = out.reshape(o_ref.shape).astype(o_ref.dtype)


def _choose_n_bh(bh, w, target_rows=256):
    """Rows-of-H tiles: tm = n_bh * W, aiming ~target_rows, sublane aligned,
    preferring exact divisors of B*H so every block is full."""
    if bh * w <= max(target_rows, 8):
        return bh                              # single full tile
    align = 8 // math.gcd(w, 8)                # makes tm a multiple of 8
    cand = list(range(align, bh + 1, align))
    if not cand:
        return bh
    divisors = [m for m in cand if bh % m == 0]
    pool = divisors if divisors else cand
    return min(pool, key=lambda m: (abs(m * w - target_rows), m))


def final_patch_expand_x4(x, expand_w, ln_gamma, ln_beta, input_resolution,
                          dim_scale=4, eps=1e-5, out_dtype=jnp.bfloat16,
                          target_rows=256):
    """FinalPatchExpand_X4.forward.

    x        : (B, L, dim), L == H*W
    expand_w : (dim, 16*dim) == nn.Linear(dim, 16*dim, bias=False).weight.T
    ln_gamma : (dim,)  LayerNorm weight
    ln_beta  : (dim,)  LayerNorm bias
    returns  : (B, 16*L, dim) in `out_dtype` (bf16 by default to halve HBM writes)
    """
    H, W = input_resolution
    B, L, dim = x.shape
    assert L == H * W, "input feature has wrong size"
    p = dim_scale
    pdim = p * dim                       # per-strip width (contains p groups of dim)
    n_out = p * p * dim
    assert expand_w.shape == (dim, n_out)

    BH = B * H
    M = BH * W

    # ---------------- host-side constant prep (tiny, one-off) ----------------
    w32 = expand_w.astype(jnp.float32)
    # Fold the LN per-group mean subtraction into the weight: center each
    # group's columns (exact in f32), so x @ Wc == y - mean_group.
    w_grp = w32.reshape(dim, p * p, dim)
    w_cent = w_grp - jnp.mean(w_grp, axis=2, keepdims=True)
    wc_strips = (w_cent.reshape(dim, p, p, dim)      # (dim, p1, p2, c)
                 .transpose(1, 0, 2, 3)              # (p1, dim, p2, c)
                 .reshape(p, dim, pdim)
                 .astype(jnp.bfloat16))

    gid = jnp.arange(pdim, dtype=jnp.int32) // dim               # p2 group id
    onehot = gid[:, None] == jnp.arange(p, dtype=jnp.int32)[None, :]
    red = onehot.astype(jnp.bfloat16)                            # (pdim, p), 1.0s exact in bf16
    gamma_t = jnp.tile(ln_gamma.astype(jnp.float32), p)          # (pdim,)
    gb = (onehot.T.astype(jnp.float32) * gamma_t[None, :]).astype(jnp.bfloat16)  # (p, pdim)
    beta_row = jnp.tile(ln_beta.astype(jnp.float32), p).reshape(1, pdim)

    x2 = x.reshape(M, dim).astype(jnp.bfloat16)

    # ---------------- tiling ----------------
    n_bh = _choose_n_bh(BH, W, target_rows)
    tm = n_bh * W
    grid_bh = pl.cdiv(BH, n_bh)

    out_itemsize = jnp.dtype(out_dtype).itemsize
    vmem_est = (2 * tm * dim * 2                     # x double buffer (bf16)
                + 2 * tm * pdim * out_itemsize       # out double buffer
                + 2 * p * dim * pdim * 2             # resident weight strips
                + 6 * tm * pdim * 4                  # fp32 intermediates headroom
                + 8 * pdim * 4)
    vmem_limit = int(min(max(2 * vmem_est, 16 * 2 ** 20), 48 * 2 ** 20))

    kernel = functools.partial(_expand_ln_kernel, inv_dim=1.0 / dim,
                               eps=float(eps))

    out4 = pl.pallas_call(
        kernel,
        out_shape=jax.ShapeDtypeStruct((BH, p, W, pdim), out_dtype),
        grid_spec=pltpu.PrefetchScalarGridSpec(
            num_scalar_prefetch=0,
            grid=(grid_bh, p),                       # p1 is the inner axis ->
            in_specs=[                               # x block index is constant
                pl.BlockSpec((tm, dim), lambda i, j: (i, 0)),        # across it (fetched once).
                pl.BlockSpec((p, dim, pdim), lambda i, j: (0, 0, 0)),  # weights resident
                pl.BlockSpec((pdim, p), lambda i, j: (0, 0)),        # group reduce
                pl.BlockSpec((p, pdim), lambda i, j: (0, 0)),        # gamma broadcast
                pl.BlockSpec((1, pdim), lambda i, j: (0, 0)),        # beta row
            ],
            out_specs=pl.BlockSpec((n_bh, 1, W, pdim),
                                   lambda i, j: (i, j, 0, 0)),
        ),
        compiler_params=pltpu.CompilerParams(
            dimension_semantics=("parallel", "parallel"),
            vmem_limit_bytes=vmem_limit),
    )(x2, wc_strips, red, gb, beta_row)

    # (BH, p1, W, p2*dim) is already in (b, h, p1, w, p2, c) row-major order:
    # the rearrange is just this free reshape (no transpose, no extra HBM pass).
    return out4.reshape(B, (H * p) * (W * p), dim)


# --------------------------------------------------------------------------
# Pure-JAX fp32 reference (mirrors the PyTorch module exactly).
# --------------------------------------------------------------------------
def _reference(x, expand_w, ln_gamma, ln_beta, input_resolution, dim_scale=4,
               eps=1e-5):
    H, W = input_resolution
    B, L, dim = x.shape
    p = dim_scale
    y = jnp.einsum("blk,kn->bln", x, expand_w)                      # expand
    y = y.reshape(B, H, W, p, p, dim).transpose(0, 1, 3, 2, 4, 5)   # rearrange
    y = y.reshape(B, (H * p) * (W * p), dim)
    mu = jnp.mean(y, axis=-1, keepdims=True)
    var = jnp.mean((y - mu) ** 2, axis=-1, keepdims=True)
    return (y - mu) * jax.lax.rsqrt(var + eps) * ln_gamma + ln_beta


# --------------------------------------------------------------------------
if __name__ == "__main__":
    key = jax.random.PRNGKey(0)
    kx, kw, kg, kb = jax.random.split(key, 4)

    B, H, W, dim = 2, 8, 8, 32                  # small FinalPatchExpand_X4 config
    L = H * W
    x = jax.random.normal(kx, (B, L, dim), jnp.float32)
    expand_w = jax.random.normal(kw, (dim, 16 * dim), jnp.float32) * 0.02
    ln_gamma = 1.0 + 0.05 * jax.random.normal(kg, (dim,), jnp.float32)
    ln_beta = 0.05 * jax.random.normal(kb, (dim,), jnp.float32)

    out = final_patch_expand_x4(x, expand_w, ln_gamma, ln_beta, (H, W))
    out = jax.block_until_ready(out)

    assert out.shape == (B, 16 * L, dim), out.shape
    out_f32 = out.astype(jnp.float32)
    assert bool(jnp.all(jnp.isfinite(out_f32)))

    ref = _reference(x, expand_w, ln_gamma, ln_beta, (H, W))
    # bf16 MXU operands / bf16 output vs fp32 reference -> loose tolerance.
    err = float(jnp.max(jnp.abs(out_f32 - ref)))
    assert bool(jnp.allclose(out_f32, ref, atol=5e-2, rtol=5e-2)), err
    print("KERNEL_OK")
</pallas_src>

<mosaic_0001>
module attributes {stable_mosaic.version = 11 : i64} {
  func.func @_expand_ln_kernel(%arg0: i32, %arg1: i32, %arg2: memref<128x32xbf16, #tpu.memory_space<vmem>>, %arg3: memref<4x32x128xbf16, #tpu.memory_space<vmem>>, %arg4: memref<128x4xbf16, #tpu.memory_space<vmem>>, %arg5: memref<4x128xbf16, #tpu.memory_space<vmem>>, %arg6: memref<1x128xf32, #tpu.memory_space<vmem>>, %arg7: memref<16x1x8x128xbf16, #tpu.memory_space<vmem>>) attributes {dimension_semantics = [#tpu.dimension_semantics<parallel>, #tpu.dimension_semantics<parallel>], iteration_bounds = array<i64: 1, 4>, scalar_prefetch = 0 : i64, scratch_operands = 0 : i64, tpu.core_type = #tpu.core_type<tc>, window_params = [{transform_indices = @transform_0, window_bounds = array<i64: 128, 32>}, {pipeline_mode = #tpu.pipeline_mode<synchronous>, transform_indices = @transform_1, window_bounds = array<i64: 4, 32, 128>}, {pipeline_mode = #tpu.pipeline_mode<synchronous>, transform_indices = @transform_2, window_bounds = array<i64: 128, 4>}, {pipeline_mode = #tpu.pipeline_mode<synchronous>, transform_indices = @transform_3, window_bounds = array<i64: 4, 128>}, {pipeline_mode = #tpu.pipeline_mode<synchronous>, transform_indices = @transform_4, window_bounds = array<i64: 1, 128>}, {transform_indices = @transform_5, window_bounds = array<i64: 16, 1, 8, 128>}]} {
    %c0 = arith.constant 0 : index
    %c0_0 = arith.constant 0 : index
    %0 = vector.load %arg2[%c0, %c0_0] : memref<128x32xbf16, #tpu.memory_space<vmem>>, vector<128x32xbf16>
    %1 = arith.index_cast %arg1 : i32 to index
    %c0_1 = arith.constant 0 : index
    %c0_2 = arith.constant 0 : index
    %2 = vector.load %arg3[%1, %c0_1, %c0_2] : memref<4x32x128xbf16, #tpu.memory_space<vmem>>, vector<1x32x128xbf16>
    %3 = vector.shape_cast %2 : vector<1x32x128xbf16> to vector<32x128xbf16>
    %cst = arith.constant dense<0.000000e+00> : vector<128x128xf32>
    %4 = tpu.matmul %0, %3, %cst {dimension_numbers = #tpu.dot_dimension_numbers<[1], [0], [0], [1], [0, 0, 1, 1], [], []>} : vector<128x32xbf16>, vector<32x128xbf16>, vector<128x128xf32> -> vector<128x128xf32>
    %5 = arith.mulf %4, %4 : vector<128x128xf32>
    %6 = arith.truncf %5 : vector<128x128xf32> to vector<128x128xbf16>
    %c0_3 = arith.constant 0 : index
    %c0_4 = arith.constant 0 : index
    %7 = vector.load %arg4[%c0_3, %c0_4] : memref<128x4xbf16, #tpu.memory_space<vmem>>, vector<128x4xbf16>
    %cst_5 = arith.constant dense<0.000000e+00> : vector<128x4xf32>
    %8 = tpu.matmul %6, %7, %cst_5 {dimension_numbers = #tpu.dot_dimension_numbers<[1], [0], [0], [1], [0, 0, 1, 1], [], []>} : vector<128x128xbf16>, vector<128x4xbf16>, vector<128x4xf32> -> vector<128x4xf32>
    %cst_6 = arith.constant 3.125000e-02 : f32
    %9 = vector.broadcast %cst_6 : f32 to vector<128x4xf32>
    %10 = arith.mulf %8, %9 : vector<128x4xf32>
    %cst_7 = arith.constant 9.99999974E-6 : f32
    %11 = vector.broadcast %cst_7 : f32 to vector<128x4xf32>
    %12 = arith.addf %10, %11 : vector<128x4xf32>
    %13 = math.rsqrt %12 : vector<128x4xf32>
    %14 = arith.truncf %13 : vector<128x4xf32> to vector<128x4xbf16>
    %c0_8 = arith.constant 0 : index
    %c0_9 = arith.constant 0 : index
    %15 = vector.load %arg5[%c0_8, %c0_9] : memref<4x128xbf16, #tpu.memory_space<vmem>>, vector<4x128xbf16>
    %cst_10 = arith.constant dense<0.000000e+00> : vector<128x128xf32>
    %16 = tpu.matmul %14, %15, %cst_10 {dimension_numbers = #tpu.dot_dimension_numbers<[1], [0], [0], [1], [0, 0, 1, 1], [], []>} : vector<128x4xbf16>, vector<4x128xbf16>, vector<128x128xf32> -> vector<128x128xf32>
    %17 = arith.mulf %4, %16 : vector<128x128xf32>
    %c0_11 = arith.constant 0 : index
    %c0_12 = arith.constant 0 : index
    %18 = vector.load %arg6[%c0_11, %c0_12] : memref<1x128xf32, #tpu.memory_space<vmem>>, vector<1x128xf32>
    %19 = vector.broadcast %18 : vector<1x128xf32> to vector<128x128xf32>
    %20 = arith.addf %17, %19 : vector<128x128xf32>
    %21 = vector.shape_cast %20 : vector<128x128xf32> to vector<16x1x8x128xf32>
    %22 = arith.truncf %21 : vector<16x1x8x128xf32> to vector<16x1x8x128xbf16>
    %c0_13 = arith.constant 0 : index
    %c0_14 = arith.constant 0 : index
    %c0_15 = arith.constant 0 : index
    %c0_16 = arith.constant 0 : index
    %23 = vector.load %arg7[%c0_13, %c0_14, %c0_15, %c0_16] : memref<16x1x8x128xbf16, #tpu.memory_space<vmem>>, vector<16x1x8x128xbf16>
    tpu.vector_store %arg7[%c0_13, %c0_14, %c0_15, %c0_16], %22 {strides = array<i32>} : memref<16x1x8x128xbf16, #tpu.memory_space<vmem>>, vector<16x1x8x128xbf16>,
    return
  }
  func.func @transform_0(%arg0: i32, %arg1: i32) -> (i32, i32) {
    %c0_i32 = arith.constant 0 : i32
    %c0_i32_0 = arith.constant 0 : i32
    return %arg0, %c0_i32 : i32, i32
  }
  func.func @transform_1(%arg0: i32, %arg1: i32) -> (i32, i32, i32) {
    %c0_i32 = arith.constant 0 : i32
    %c0_i32_0 = arith.constant 0 : i32
    %c0_i32_1 = arith.constant 0 : i32
    %c0_i32_2 = arith.constant 0 : i32
    return %c0_i32, %c0_i32_0, %c0_i32_1 : i32, i32, i32
  }
  func.func @transform_2(%arg0: i32, %arg1: i32) -> (i32, i32) {
    %c0_i32 = arith.constant 0 : i32
    %c0_i32_0 = arith.constant 0 : i32
    %c0_i32_1 = arith.constant 0 : i32
    return %c0_i32, %c0_i32_0 : i32, i32
  }
  func.func @transform_3(%arg0: i32, %arg1: i32) -> (i32, i32) {
    %c0_i32 = arith.constant 0 : i32
    %c0_i32_0 = arith.constant 0 : i32
    %c0_i32_1 = arith.constant 0 : i32
    return %c0_i32, %c0_i32_0 : i32, i32
  }
  func.func @transform_4(%arg0: i32, %arg1: i32) -> (i32, i32) {
    %c0_i32 = arith.constant 0 : i32
    %c0_i32_0 = arith.constant 0 : i32
    %c0_i32_1 = arith.constant 0 : i32
    return %c0_i32, %c0_i32_0 : i32, i32
  }
  func.func @transform_5(%arg0: i32, %arg1: i32) -> (i32, i32, i32, i32) {
    %c0_i32 = arith.constant 0 : i32
    %c0_i32_0 = arith.constant 0 : i32
    %c0_i32_1 = arith.constant 0 : i32
    return %arg0, %arg1, %c0_i32, %c0_i32_0 : i32, i32, i32, i32
  }
}

</mosaic_0001>

<llo_original>
// kernel: tpu_custom_call.1
$region0: #{tpu_custom_call.1}
  #allocation0 [shape = 'u32[]', space=smem, size = 0x4, offset = 0x4, fixed_abs, tag = 'smem constant byte address 0x4 - core index']
  #allocation1 [shape = 'u32[72,128]{1,0:T(1,128)}', space=vmem, size = 0x9000, scoped, tag = 'internal scratch']
  %s0 = inlined_call_operand.vmem [shape: bf16[128,32], index: 0, kind: input, shape index: {}]
  %s1 = inlined_call_operand.vmem [shape: bf16[4,32,128], index: 1, kind: input, shape index: {}]
  %s2 = inlined_call_operand.vmem [shape: bf16[128,4], index: 2, kind: input, shape index: {}]
  %s3 = inlined_call_operand.vmem [shape: bf16[4,128], index: 3, kind: input, shape index: {}]
  %s4 = inlined_call_operand.vmem [shape: f32[1,128], index: 4, kind: input, shape index: {}]
  %s5 = inlined_call_operand.hbm [shape: bf16[16,4,8,128], index: 5, kind: output, shape index: {}]
  %s6 = sld [smem:[#allocation0]]
  $region53: #{tpu_custom_call.1} parent=0
    _
  %s8 = ssub.s32 1, %s6
  %s9 = scalar_select 0, %s8, %s6
  $region1: #{tpu_custom_call.1} parent=0
    #allocation2 [shape = 'u8[65536]{0}', space=vmem, size = 0x10000, scoped, tag = 'output window, operand 0']
    #allocation3 [shape = 's32[2]{0}', space=sflag, size = 0x8, scoped, tag = 'scoped memory for tpu_custom_call.1']
    %10 = vsyncpa [#allocation3], 0
    %s11 = scalar_lea.sflag [#allocation3], 1
    %12 = vsyncpa %s11, 0
    loop: start=0, step=1, limit=6
    $region2: #{tpu_custom_call.1} parent=1 // loop_pre_header
      _
    $region3: #{tpu_custom_call.1} parent=1 // loop_header
      %s14 = sphi 0, %s18
      %p15 = scmp.ge.s32.totalorder %s14, 6
      %s21 = sphi 0, %s33
      %s22 = sphi 0, %s29
      %s23 = sphi 0, %s21
      %s24 = sphi 0, %s22
      %s25 = sphi 0, %s23
      %s26 = sphi 0, %s24
      %s36 = sphi 0, %s38
      %s39 = sphi 0, %s36
      %s40 = sphi 0, %s39
      %s56 = sphi 0, %s40
      %s60 = sphi 0, %s60
      %s62 = sphi 0, %s60
      %s63 = sphi 0, %s62
      %s77 = sphi 0, %s63
      %s81 = sphi 0, %s81
      %s83 = sphi 0, %s81
      %s84 = sphi 0, %s83
      %s98 = sphi 0, %s84
      %s102 = sphi 0, %s102
      %s104 = sphi 0, %s102
      %s105 = sphi 0, %s104
      %s119 = sphi 0, %s105
      %s123 = sphi 0, %s123
      %s125 = sphi 0, %s123
      %s126 = sphi 0, %s125
      %s140 = sphi 0, %s126
      %s148 = sphi 0, %s150
      %s151 = sphi 0, %s148
      %s152 = sphi 0, %s151
      %s168 = sphi 0, %s152
    $region4: #{tpu_custom_call.1} parent=1 // loop_header_branch
      %17 = sbr.rel (%p15) target = $region8
    $region5: #{tpu_custom_call.1} parent=1 // loop_body
      %s19 = ssub.s32 %s14, 1
      %s20 = ssub.s32 %s14, 2
      %s27 = sadd.s32 1, %s22
      %p28 = scmp.ge.s32.totalorder %s27, 4
      %s29 = scalar_select %p28, 0, %s27
      %s30 = sadd.s32 1, %s21
      %s31 = scalar_select %p28, %s30, %s21
      %p32 = scmp.ge.s32.totalorder %s31, 1
      %s33 = scalar_select %p32, 0, %s31
      %s34 = ssub.s32 %s21, %s33
      %p35 = scmp.eq.s32.totalorder %s34, 0
      %s37 = sadd.s32 %s36, 1
      %s38 = scalar_select %p35, %s36, %s37
      %p41 = pneg %p35
      %p42 = scmp.eq.s32.totalorder %s14, 3
      %p43 = por %p41, %p42
      %p44 = scmp.ne.s32.totalorder %s36, %s39
      %p45 = scmp.eq.s32.totalorder %s14, 0
      %p46 = por %p44, %p45
      %p47 = scmp.ne.s32.totalorder %s36, %s39
      %p48 = scmp.eq.s32.totalorder %s19, 3
      %p49 = por %p47, %p48
      %p50 = scmp.ne.s32.totalorder %s39, %s40
      %p51 = scmp.eq.s32.totalorder %s19, 0
      %p52 = por %p50, %p51
      %p53 = scmp.ne.s32.totalorder %s39, %s40
      %p54 = scmp.eq.s32.totalorder %s20, 3
      %p55 = por %p53, %p54
      %p57 = scmp.ne.s32.totalorder %s40, %s56
      %p58 = scmp.eq.s32.totalorder %s20, 0
      %p59 = por %p57, %p58
      %s61 = sadd.s32 %s60, 1
      %p64 = scmp.eq.s32.totalorder %s14, 3
      %p65 = scmp.ne.s32.totalorder %s60, %s62
      %p66 = scmp.eq.s32.totalorder %s14, 0
      %p67 = por %p65, %p66
      %p68 = scmp.ne.s32.totalorder %s60, %s62
      %p69 = scmp.eq.s32.totalorder %s19, 3
      %p70 = por %p68, %p69
      %p71 = scmp.ne.s32.totalorder %s62, %s63
      %p72 = scmp.eq.s32.totalorder %s19, 0
      %p73 = por %p71, %p72
      %p74 = scmp.ne.s32.totalorder %s62, %s63
      %p75 = scmp.eq.s32.totalorder %s20, 3
      %p76 = por %p74, %p75
      %p78 = scmp.ne.s32.totalorder %s63, %s77
      %p79 = scmp.eq.s32.totalorder %s20, 0
      %p80 = por %p78, %p79
      %s82 = sadd.s32 %s81, 1
      %p85 = scmp.eq.s32.totalorder %s14, 3
      %p86 = scmp.ne.s32.totalorder %s81, %s83
      %p87 = scmp.eq.s32.totalorder %s14, 0
      %p88 = por %p86, %p87
      %p89 = scmp.ne.s32.totalorder %s81, %s83
      %p90 = scmp.eq.s32.totalorder %s19, 3
      %p91 = por %p89, %p90
      %p92 = scmp.ne.s32.totalorder %s83, %s84
      %p93 = scmp.eq.s32.totalorder %s19, 0
      %p94 = por %p92, %p93
      %p95 = scmp.ne.s32.totalorder %s83, %s84
      %p96 = scmp.eq.s32.totalorder %s20, 3
      %p97 = por %p95, %p96
      %p99 = scmp.ne.s32.totalorder %s84, %s98
      %p100 = scmp.eq.s32.totalorder %s20, 0
      %p101 = por %p99, %p100
      %s103 = sadd.s32 %s102, 1
      %p106 = scmp.eq.s32.totalorder %s14, 3
      %p107 = scmp.ne.s32.totalorder %s102, %s104
      %p108 = scmp.eq.s32.totalorder %s14, 0
      %p109 = por %p107, %p108
      %p110 = scmp.ne.s32.totalorder %s102, %s104
      %p111 = scmp.eq.s32.totalorder %s19, 3
      %p112 = por %p110, %p111
      %p113 = scmp.ne.s32.totalorder %s104, %s105
      %p114 = scmp.eq.s32.totalorder %s19, 0
      %p115 = por %p113, %p114
      %p116 = scmp.ne.s32.totalorder %s104, %s105
      %p117 = scmp.eq.s32.totalorder %s20, 3
      %p118 = por %p116, %p117
      %p120 = scmp.ne.s32.totalorder %s105, %s119
      %p121 = scmp.eq.s32.totalorder %s20, 0
      %p122 = por %p120, %p121
      %s124 = sadd.s32 %s123, 1
      %p127 = scmp.eq.s32.totalorder %s14, 3
      %p128 = scmp.ne.s32.totalorder %s123, %s125
      %p129 = scmp.eq.s32.totalorder %s14, 0
      %p130 = por %p128, %p129
      %p131 = scmp.ne.s32.totalorder %s123, %s125
      %p132 = scmp.eq.s32.totalorder %s19, 3
      %p133 = por %p131, %p132
      %p134 = scmp.ne.s32.totalorder %s125, %s126
      %p135 = scmp.eq.s32.totalorder %s19, 0
      %p136 = por %p134, %p135
      %p137 = scmp.ne.s32.totalorder %s125, %s126
      %p138 = scmp.eq.s32.totalorder %s20, 3
      %p139 = por %p137, %p138
      %p141 = scmp.ne.s32.totalorder %s126, %s140
      %p142 = scmp.eq.s32.totalorder %s20, 0
      %p143 = por %p141, %p142
      %s144 = ssub.s32 %s21, %s33
      %s145 = ssub.s32 %s22, %s29
      %s146 = sor.u32 %s144, %s145
      %p147 = scmp.eq.s32.totalorder %s146, 0
      %s149 = sadd.s32 %s148, 1
      %s150 = scalar_select %p147, %s148, %s149
      %p153 = pneg %p147
      %p154 = scmp.eq.s32.totalorder %s14, 3
      %p155 = por %p153, %p154
      %p156 = scmp.ne.s32.totalorder %s148, %s151
      %p157 = scmp.eq.s32.totalorder %s14, 0
      %p158 = por %p156, %p157
      %p159 = scmp.ne.s32.totalorder %s148, %s151
      %p160 = scmp.eq.s32.totalorder %s19, 3
      %p161 = por %p159, %p160
      %p162 = scmp.ne.s32.totalorder %s151, %s152
      %p163 = scmp.eq.s32.totalorder %s19, 0
      %p164 = por %p162, %p163
      %p165 = scmp.ne.s32.totalorder %s151, %s152
      %p166 = scmp.eq.s32.totalorder %s20, 3
      %p167 = por %p165, %p166
      %p169 = scmp.ne.s32.totalorder %s152, %s168
      %p170 = scmp.eq.s32.totalorder %s20, 0
      %p171 = por %p169, %p170
      %p172 = scmp.le.s32.totalorder 1, %s14
      %p173 = scmp.lt.s32.totalorder %s14, 5
      %p174 = pnand %p172, %p173
      %p175 = pneg %p174
      // Predicated region
      $region9: #{tpu_custom_call.1} parent=5 // pred_check
        _
      $region10: #{tpu_custom_call.1} parent=5 // pred_check_branch
        %177 = sbr.rel (%p174) target = $region12
      $region11: #{tpu_custom_call.1} parent=5 // pred_region
        %s178 = ssub.s32 %s14, 1
        // Predicated region
        $region13: #{tpu_custom_call.1} parent=11 // pred_check
          %p179 = pneg %p52
        $region14: #{tpu_custom_call.1} parent=11 // pred_check_branch
          %181 = sbr.rel (%p179) target = $region16
        $region15: #{tpu_custom_call.1} parent=11 // pred_region
          %s182 = smul.u32 16, %s23
          %p183 = scmp.lt.s32.totalorder %s182, 15
          %s184 = scalar_select %p183, %s182, 15
          %s185 = smul.addr %s184, 4
          %s186 = scalar_lea.vmem %s0, %s185
          %s187 = smul.u32 16, %s23
        $region16: #{tpu_custom_call.1} parent=11 // pred_fallthru
          _
        // Predicated region
        $region17: #{tpu_custom_call.1} parent=11 // pred_check
          %p188 = pneg %p73
        $region18: #{tpu_custom_call.1} parent=11 // pred_check_branch
          %190 = sbr.rel (%p188) target = $region20
        $region19: #{tpu_custom_call.1} parent=11 // pred_region
          _
        $region20: #{tpu_custom_call.1} parent=11 // pred_fallthru
          _
        // Predicated region
        $region21: #{tpu_custom_call.1} parent=11 // pred_check
          %p191 = pneg %p94
        $region22: #{tpu_custom_call.1} parent=11 // pred_check_branch
          %193 = sbr.rel (%p191) target = $region24
        $region23: #{tpu_custom_call.1} parent=11 // pred_region
          _
        $region24: #{tpu_custom_call.1} parent=11 // pred_fallthru
          _
        // Predicated region
        $region25: #{tpu_custom_call.1} parent=11 // pred_check
          %p194 = pneg %p115
        $region26: #{tpu_custom_call.1} parent=11 // pred_check_branch
          %196 = sbr.rel (%p194) target = $region28
        $region27: #{tpu_custom_call.1} parent=11 // pred_region
          _
        $region28: #{tpu_custom_call.1} parent=11 // pred_fallthru
          _
        // Predicated region
        $region29: #{tpu_custom_call.1} parent=11 // pred_check
          %p197 = pneg %p136
        $region30: #{tpu_custom_call.1} parent=11 // pred_check_branch
          %199 = sbr.rel (%p197) target = $region32
        $region31: #{tpu_custom_call.1} parent=11 // pred_region
          _
        $region32: #{tpu_custom_call.1} parent=11 // pred_fallthru
          _
      $region12: #{tpu_custom_call.1} parent=5 // pred_fallthru
        _
      %p200 = scmp.lt.s32.totalorder %s14, 4
      // Predicated region
      $region33: #{tpu_custom_call.1} parent=5 // pred_check
        %p201 = pneg %p200
      $region34: #{tpu_custom_call.1} parent=5 // pred_check_branch
        %203 = sbr.rel (%p201) target = $region36
      $region35: #{tpu_custom_call.1} parent=5 // pred_region
        _
      $region36: #{tpu_custom_call.1} parent=5 // pred_fallthru
        _
      %p204 = scmp.le.s32.totalorder 1, %s14
      %p205 = scmp.lt.s32.totalorder %s14, 5
      %p206 = pnand %p204, %p205
      %p207 = pneg %p206
      // Predicated region
      $region37: #{tpu_custom_call.1} parent=5 // pred_check
        _
      $region38: #{tpu_custom_call.1} parent=5 // pred_check_branch
        %209 = sbr.rel (%p206) target = $region40
      $region39: #{tpu_custom_call.1} parent=5 // pred_region
        %s210 = ssub.s32 %s14, 1
        %s211 = smul.u32 16, %s23
        %p212 = scmp.lt.s32.totalorder %s211, 15
        %s213 = scalar_select %p212, %s211, 15
        %s214 = smul.addr %s213, 4
        %s215 = scalar_lea.vmem %s0, %s214
        %p216 = pneg %p52
        %p217 = pneg %p49
        %p218 = pneg %p73
        %p219 = pneg %p70
        %p220 = pneg %p94
        %p221 = pneg %p91
        %p222 = pneg %p115
        %p223 = pneg %p112
        %p224 = pneg %p136
        %p225 = pneg %p133
        %p226 = pneg %p164
        %p227 = pneg %p161
        %s228 = sand.u32 %s151, 1
        %s229 = scalar_lea.sflag [#allocation3], %s228
        %s230 = sand.u32 %s151, 1
        %s231 = smul.addr %s230, 64
        %s232 = scalar_lea.vmem [#allocation2], %s231
        %s233 = smul.u32 16, %s23
        %p234 = scmp.lt.s32.totalorder %s233, 15
        %s235 = scalar_select %p234, %s233, 15
        %s236 = smul.addr %s235, 4
        %s237 = scalar_lea.vmem %s0, %s236
        %s238 = smul.u32 16, %s23
        %s239 = smul.u32 16, %s23
        %v241 = vld [vmem:[%s237] sm:$0xf]
        %v242 = vld [vmem:[%s237 + $0x4] sm:$0xf]
        %v243 = vld [vmem:[%s237 + $0x8] sm:$0xf]
        %v244 = vld [vmem:[%s237 + $0xc] sm:$0xf]
        %v245 = vld [vmem:[%s237 + $0x10] sm:$0xf]
        %v246 = vld [vmem:[%s237 + $0x14] sm:$0xf]
        %v247 = vld [vmem:[%s237 + $0x18] sm:$0xf]
        %v248 = vld [vmem:[%s237 + $0x1c] sm:$0xf]
        %v249 = vld [vmem:[%s237 + $0x20] sm:$0xf]
        %v250 = vld [vmem:[%s237 + $0x24] sm:$0xf]
        %v251 = vld [vmem:[%s237 + $0x28] sm:$0xf]
        %v252 = vld [vmem:[%s237 + $0x2c] sm:$0xf]
        %v253 = vld [vmem:[%s237 + $0x30] sm:$0xf]
        %v254 = vld [vmem:[%s237 + $0x34] sm:$0xf]
        %v255 = vld [vmem:[%s237 + $0x38] sm:$0xf]
        %v256 = vld [vmem:[%s237 + $0x3c] sm:$0xf]
        %s257 = smul.u32 %s24, 4
        %s258 = smul.addr %s257, 4
        %s259 = scalar_lea.vmem %s1, %s258
        %v260 = vld [vmem:[%s259] sm:$0xf]
        %v261 = vld [vmem:[%s259 + $0x4] sm:$0xf]
        %v262 = vld [vmem:[%s259 + $0x8] sm:$0xf]
        %v263 = vld [vmem:[%s259 + $0xc] sm:$0xf]
        %v280 = vunpack.c.l.b16 %v241
        %v281 = vunpack.c.l.b16 %v242
        %v282 = vunpack.c.l.b16 %v243
        %v283 = vunpack.c.l.b16 %v244
        %v284 = vunpack.c.l.b16 %v245
        %v285 = vunpack.c.l.b16 %v246
        %v286 = vunpack.c.l.b16 %v247
        %v287 = vunpack.c.l.b16 %v248
        %v288 = vunpack.c.l.b16 %v249
        %v289 = vunpack.c.l.b16 %v250
        %v290 = vunpack.c.l.b16 %v251
        %v291 = vunpack.c.l.b16 %v252
        %v292 = vunpack.c.l.b16 %v253
        %v293 = vunpack.c.l.b16 %v254
        %v294 = vunpack.c.l.b16 %v255
        %v295 = vunpack.c.l.b16 %v256
        %v296 = vpack.c.b16 %v281, %v280
        %v297 = vpack.c.b16 %v283, %v282
        %v298 = vpack.c.b16 %v285, %v284
        %v299 = vpack.c.b16 %v287, %v286
        %v300 = vpack.c.b16 %v289, %v288
        %v301 = vpack.c.b16 %v291, %v290
        %v302 = vpack.c.b16 %v293, %v292
        %v303 = vpack.c.b16 %v295, %v294
        %v308 = vunpack.c.l.b16 %v260
        %v309 = vunpack.c.l.b16 %v261
        %v310 = vunpack.c.l.b16 %v262
        %v311 = vunpack.c.l.b16 %v263
        %v312 = vpack.c.b16 %v309, %v308
        %v313 = vpack.c.b16 %v311, %v310
        %vm316 = vcmask 261120
        %v318 = vsel %vm316, %v296, 0
        %v321 = vsel %vm316, %v297, 0
        %v324 = vsel %vm316, %v298, 0
        %v327 = vsel %vm316, %v299, 0
        %v330 = vsel %vm316, %v300, 0
        %v333 = vsel %vm316, %v301, 0
        %v336 = vsel %vm316, %v302, 0
        %v339 = vsel %vm316, %v303, 0
        %341 = vmatpush.bf16.msra.mxu0 0
        %342 = vmatpush.bf16.msra.mxu0 0
        %343 = vmatpush.bf16.msra.mxu0 0
        %344 = vmatpush.bf16.msra.mxu0 0
        %345 = vmatpush.bf16.msra.mxu0 0
        %346 = vmatpush.bf16.msra.mxu0 0
        %347 = vmatpush.bf16.msra.mxu0 %v313
        %348 = vmatpush.bf16.msra.mxu0 %v312
        %349 = vmatmul.bf16.gmra.mxu0 %v318
        %v350 = vpop.f32.mrf.mxu0
        %v351 = vadd.f32 0.0, %v350
        %v352 = vpop.f32.mrf.mxu0
        %v353 = vadd.f32 0.0, %v352
        %354 = vmatmul.bf16.gmra.mxu0 %v321
        %v355 = vpop.f32.mrf.mxu0
        %v356 = vadd.f32 0.0, %v355
        %v357 = vpop.f32.mrf.mxu0
        %v358 = vadd.f32 0.0, %v357
        %359 = vmatmul.bf16.gmra.mxu0 %v324
        %v360 = vpop.f32.mrf.mxu0
        %v361 = vadd.f32 0.0, %v360
        %v362 = vpop.f32.mrf.mxu0
        %v363 = vadd.f32 0.0, %v362
        %364 = vmatmul.bf16.gmra.mxu0 %v327
        %v365 = vpop.f32.mrf.mxu0
        %v366 = vadd.f32 0.0, %v365
        %v367 = vpop.f32.mrf.mxu0
        %v368 = vadd.f32 0.0, %v367
        %369 = vmatmul.bf16.gmra.mxu0 %v330
        %v370 = vpop.f32.mrf.mxu0
        %v371 = vadd.f32 0.0, %v370
        %v372 = vpop.f32.mrf.mxu0
        %v373 = vadd.f32 0.0, %v372
        %374 = vmatmul.bf16.gmra.mxu0 %v333
        %v375 = vpop.f32.mrf.mxu0
        %v376 = vadd.f32 0.0, %v375
        %v377 = vpop.f32.mrf.mxu0
        %v378 = vadd.f32 0.0, %v377
        %379 = vmatmul.bf16.gmra.mxu0 %v336
        %v380 = vpop.f32.mrf.mxu0
        %v381 = vadd.f32 0.0, %v380
        %v382 = vpop.f32.mrf.mxu0
        %v383 = vadd.f32 0.0, %v382
        %384 = vmatmul.bf16.gmra.mxu0 %v339
        %v385 = vpop.f32.mrf.mxu0
        %v386 = vadd.f32 0.0, %v385
        %v387 = vpop.f32.mrf.mxu0
        %v388 = vadd.f32 0.0, %v387
        %389 = vdwg.mxu0
        %v390 = vmul.f32 %v351, %v351
        %v391 = vmul.f32 %v353, %v353
        %v392 = vmul.f32 %v356, %v356
        %v393 = vmul.f32 %v358, %v358
        %v394 = vmul.f32 %v361, %v361
        %v395 = vmul.f32 %v363, %v363
        %v396 = vmul.f32 %v366, %v366
        %v397 = vmul.f32 %v368, %v368
        %v398 = vmul.f32 %v371, %v371
        %v399 = vmul.f32 %v373, %v373
        %v400 = vmul.f32 %v376, %v376
        %v401 = vmul.f32 %v378, %v378
        %v402 = vmul.f32 %v381, %v381
        %v403 = vmul.f32 %v383, %v383
        %v404 = vmul.f32 %v386, %v386
        %v405 = vmul.f32 %v388, %v388
        %v406 = vpack.c.bf16 %v391, %v390
        %v407 = vpack.c.bf16 %v393, %v392
        %v408 = vpack.c.bf16 %v395, %v394
        %v409 = vpack.c.bf16 %v397, %v396
        %v410 = vpack.c.bf16 %v399, %v398
        %v411 = vpack.c.bf16 %v401, %v400
        %v412 = vpack.c.bf16 %v403, %v402
        %v413 = vpack.c.bf16 %v405, %v404
        %v414 = vld [vmem:[%s2] sm:$0xf]
        %v415 = vld [vmem:[%s2 + $0x4] sm:$0xf]
        %v416 = vld [vmem:[%s2 + $0x8] sm:$0xf]
        %v417 = vld [vmem:[%s2 + $0xc] sm:$0xf]
        %v418 = vld [vmem:[%s2 + $0x10] sm:$0xf]
        %v419 = vld [vmem:[%s2 + $0x14] sm:$0xf]
        %v420 = vld [vmem:[%s2 + $0x18] sm:$0xf]
        %v421 = vld [vmem:[%s2 + $0x1c] sm:$0xf]
        %v422 = vld [vmem:[%s2 + $0x20] sm:$0xf]
        %v423 = vld [vmem:[%s2 + $0x24] sm:$0xf]
        %v424 = vld [vmem:[%s2 + $0x28] sm:$0xf]
        %v425 = vld [vmem:[%s2 + $0x2c] sm:$0xf]
        %v426 = vld [vmem:[%s2 + $0x30] sm:$0xf]
        %v427 = vld [vmem:[%s2 + $0x34] sm:$0xf]
        %v428 = vld [vmem:[%s2 + $0x38] sm:$0xf]
        %v429 = vld [vmem:[%s2 + $0x3c] sm:$0xf]
        %v446 = vunpack.c.l.b16 %v414
        %v447 = vunpack.c.l.b16 %v415
        %v448 = vunpack.c.l.b16 %v416
        %v449 = vunpack.c.l.b16 %v417
        %v450 = vunpack.c.l.b16 %v418
        %v451 = vunpack.c.l.b16 %v419
        %v452 = vunpack.c.l.b16 %v420
        %v453 = vunpack.c.l.b16 %v421
        %v454 = vunpack.c.l.b16 %v422
        %v455 = vunpack.c.l.b16 %v423
        %v456 = vunpack.c.l.b16 %v424
        %v457 = vunpack.c.l.b16 %v425
        %v458 = vunpack.c.l.b16 %v426
        %v459 = vunpack.c.l.b16 %v427
        %v460 = vunpack.c.l.b16 %v428
        %v461 = vunpack.c.l.b16 %v429
        %v462 = vpack.c.b16 %v447, %v446
        %v463 = vpack.c.b16 %v449, %v448
        %v464 = vpack.c.b16 %v451, %v450
        %v465 = vpack.c.b16 %v453, %v452
        %v466 = vpack.c.b16 %v455, %v454
        %v467 = vpack.c.b16 %v457, %v456
        %v468 = vpack.c.b16 %v459, %v458
        %v469 = vpack.c.b16 %v461, %v460
        %478 = vmatpush.bf16.msra.mxu0 %v469
        %479 = vmatpush.bf16.msra.mxu0 %v468
        %480 = vmatpush.bf16.msra.mxu0 %v467
        %481 = vmatpush.bf16.msra.mxu0 %v466
        %482 = vmatpush.bf16.msra.mxu0 %v465
        %483 = vmatpush.bf16.msra.mxu0 %v464
        %484 = vmatpush.bf16.msra.mxu0 %v463
        %485 = vmatpush.bf16.msra.mxu0 %v462
        %486 = vmatmul.bf16.gmra.mxu0 %v406
        %v487 = vpop.f32.mrf.mxu0
        %v488 = vadd.f32 0.0, %v487
        %v489 = vpop.f32.mrf.mxu0
        %v490 = vadd.f32 0.0, %v489
        %491 = vmatmul.bf16.gmra.mxu0 %v407
        %v492 = vpop.f32.mrf.mxu0
        %v493 = vadd.f32 0.0, %v492
        %v494 = vpop.f32.mrf.mxu0
        %v495 = vadd.f32 0.0, %v494
        %496 = vmatmul.bf16.gmra.mxu0 %v408
        %v497 = vpop.f32.mrf.mxu0
        %v498 = vadd.f32 0.0, %v497
        %v499 = vpop.f32.mrf.mxu0
        %v500 = vadd.f32 0.0, %v499
        %501 = vmatmul.bf16.gmra.mxu0 %v409
        %v502 = vpop.f32.mrf.mxu0
        %v503 = vadd.f32 0.0, %v502
        %v504 = vpop.f32.mrf.mxu0
        %v505 = vadd.f32 0.0, %v504
        %506 = vmatmul.bf16.gmra.mxu0 %v410
        %v507 = vpop.f32.mrf.mxu0
        %v508 = vadd.f32 0.0, %v507
        %v509 = vpop.f32.mrf.mxu0
        %v510 = vadd.f32 0.0, %v509
        %511 = vmatmul.bf16.gmra.mxu0 %v411
        %v512 = vpop.f32.mrf.mxu0
        %v513 = vadd.f32 0.0, %v512
        %v514 = vpop.f32.mrf.mxu0
        %v515 = vadd.f32 0.0, %v514
        %516 = vmatmul.bf16.gmra.mxu0 %v412
        %v517 = vpop.f32.mrf.mxu0
        %v518 = vadd.f32 0.0, %v517
        %v519 = vpop.f32.mrf.mxu0
        %v520 = vadd.f32 0.0, %v519
        %521 = vmatmul.bf16.gmra.mxu0 %v413
        %v522 = vpop.f32.mrf.mxu0
        %v523 = vadd.f32 0.0, %v522
        %v524 = vpop.f32.mrf.mxu0
        %v525 = vadd.f32 0.0, %v524
        %526 = vdwg.mxu0
        %v527 = vmul.f32 %v488, 0.03125
        %v528 = vmul.f32 %v490, 0.03125
        %v529 = vmul.f32 %v493, 0.03125
        %v530 = vmul.f32 %v495, 0.03125
        %v531 = vmul.f32 %v498, 0.03125
        %v532 = vmul.f32 %v500, 0.03125
        %v533 = vmul.f32 %v503, 0.03125
        %v534 = vmul.f32 %v505, 0.03125
        %v535 = vmul.f32 %v508, 0.03125
        %v536 = vmul.f32 %v510, 0.03125
        %v537 = vmul.f32 %v513, 0.03125
        %v538 = vmul.f32 %v515, 0.03125
        %v539 = vmul.f32 %v518, 0.03125
        %v540 = vmul.f32 %v520, 0.03125
        %v541 = vmul.f32 %v523, 0.03125
        %v542 = vmul.f32 %v525, 0.03125
        %v543 = vadd.f32 %v527, 1e-05
        %v544 = vadd.f32 %v528, 1e-05
        %v545 = vadd.f32 %v529, 1e-05
        %v546 = vadd.f32 %v530, 1e-05
        %v547 = vadd.f32 %v531, 1e-05
        %v548 = vadd.f32 %v532, 1e-05
        %v549 = vadd.f32 %v533, 1e-05
        %v550 = vadd.f32 %v534, 1e-05
        %v551 = vadd.f32 %v535, 1e-05
        %v552 = vadd.f32 %v536, 1e-05
        %v553 = vadd.f32 %v537, 1e-05
        %v554 = vadd.f32 %v538, 1e-05
        %v555 = vadd.f32 %v539, 1e-05
        %v556 = vadd.f32 %v540, 1e-05
        %v557 = vadd.f32 %v541, 1e-05
        %v558 = vadd.f32 %v542, 1e-05
        %v559 = vrsqrt.pop %v543
        %v560 = vmul.f32 %v559, %v543
        %v561 = vmul.f32 %v560, %v559
        %v562 = vmul.f32 0.5, %v561
        %v563 = vsub.f32 1.5, %v562
        %v564 = vmul.f32 %v559, %v563
        %vm565 = vweird.f32 %v543
        %vm566 = vweird.f32 %v559
        %vm567 = vmor %vm565, %vm566
        %v568 = vsel %vm567, %v559, %v564
        %v569 = vrsqrt.pop %v544
        %v570 = vmul.f32 %v569, %v544
        %v571 = vmul.f32 %v570, %v569
        %v572 = vmul.f32 0.5, %v571
        %v573 = vsub.f32 1.5, %v572
        %v574 = vmul.f32 %v569, %v573
        %vm575 = vweird.f32 %v544
        %vm576 = vweird.f32 %v569
        %vm577 = vmor %vm575, %vm576
        %v578 = vsel %vm577, %v569, %v574
        %v579 = vrsqrt.pop %v545
        %v580 = vmul.f32 %v579, %v545
        %v581 = vmul.f32 %v580, %v579
        %v582 = vmul.f32 0.5, %v581
        %v583 = vsub.f32 1.5, %v582
        %v584 = vmul.f32 %v579, %v583
        %vm585 = vweird.f32 %v545
        %vm586 = vweird.f32 %v579
        %vm587 = vmor %vm585, %vm586
        %v588 = vsel %vm587, %v579, %v584
        %v589 = vrsqrt.pop %v546
        %v590 = vmul.f32 %v589, %v546
        %v591 = vmul.f32 %v590, %v589
        %v592 = vmul.f32 0.5, %v591
        %v593 = vsub.f32 1.5, %v592
        %v594 = vmul.f32 %v589, %v593
        %vm595 = vweird.f32 %v546
        %vm596 = vweird.f32 %v589
        %vm597 = vmor %vm595, %vm596
        %v598 = vsel %vm597, %v589, %v594
        %v599 = vrsqrt.pop %v547
        %v600 = vmul.f32 %v599, %v547
        %v601 = vmul.f32 %v600, %v599
        %v602 = vmul.f32 0.5, %v601
        %v603 = vsub.f32 1.5, %v602
        %v604 = vmul.f32 %v599, %v603
        %vm605 = vweird.f32 %v547
        %vm606 = vweird.f32 %v599
        %vm607 = vmor %vm605, %vm606
        %v608 = vsel %vm607, %v599, %v604
        %v609 = vrsqrt.pop %v548
        %v610 = vmul.f32 %v609, %v548
        %v611 = vmul.f32 %v610, %v609
        %v612 = vmul.f32 0.5, %v611
        %v613 = vsub.f32 1.5, %v612
        %v614 = vmul.f32 %v609, %v613
        %vm615 = vweird.f32 %v548
        %vm616 = vweird.f32 %v609
        %vm617 = vmor %vm615, %vm616
        %v618 = vsel %vm617, %v609, %v614
        %v619 = vrsqrt.pop %v549
        %v620 = vmul.f32 %v619, %v549
        %v621 = vmul.f32 %v620, %v619
        %v622 = vmul.f32 0.5, %v621
        %v623 = vsub.f32 1.5, %v622
        %v624 = vmul.f32 %v619, %v623
        %vm625 = vweird.f32 %v549
        %vm626 = vweird.f32 %v619
        %vm627 = vmor %vm625, %vm626
        %v628 = vsel %vm627, %v619, %v624
        %v629 = vrsqrt.pop %v550
        %v630 = vmul.f32 %v629, %v550
        %v631 = vmul.f32 %v630, %v629
        %v632 = vmul.f32 0.5, %v631
        %v633 = vsub.f32 1.5, %v632
        %v634 = vmul.f32 %v629, %v633
        %vm635 = vweird.f32 %v550
        %vm636 = vweird.f32 %v629
        %vm637 = vmor %vm635, %vm636
        %v638 = vsel %vm637, %v629, %v634
        %v639 = vrsqrt.pop %v551
        %v640 = vmul.f32 %v639, %v551
        %v641 = vmul.f32 %v640, %v639
        %v642 = vmul.f32 0.5, %v641
        %v643 = vsub.f32 1.5, %v642
        %v644 = vmul.f32 %v639, %v643
        %vm645 = vweird.f32 %v551
        %vm646 = vweird.f32 %v639
        %vm647 = vmor %vm645, %vm646
        %v648 = vsel %vm647, %v639, %v644
        %v649 = vrsqrt.pop %v552
        %v650 = vmul.f32 %v649, %v552
        %v651 = vmul.f32 %v650, %v649
        %v652 = vmul.f32 0.5, %v651
        %v653 = vsub.f32 1.5, %v652
        %v654 = vmul.f32 %v649, %v653
        %vm655 = vweird.f32 %v552
        %vm656 = vweird.f32 %v649
        %vm657 = vmor %vm655, %vm656
        %v658 = vsel %vm657, %v649, %v654
        %v659 = vrsqrt.pop %v553
        %v660 = vmul.f32 %v659, %v553
        %v661 = vmul.f32 %v660, %v659
        %v662 = vmul.f32 0.5, %v661
        %v663 = vsub.f32 1.5, %v662
        %v664 = vmul.f32 %v659, %v663
        %vm665 = vweird.f32 %v553
        %vm666 = vweird.f32 %v659
        %vm667 = vmor %vm665, %vm666
        %v668 = vsel %vm667, %v659, %v664
        %v669 = vrsqrt.pop %v554
        %v670 = vmul.f32 %v669, %v554
        %v671 = vmul.f32 %v670, %v669
        %v672 = vmul.f32 0.5, %v671
        %v673 = vsub.f32 1.5, %v672
        %v674 = vmul.f32 %v669, %v673
        %vm675 = vweird.f32 %v554
        %vm676 = vweird.f32 %v669
        %vm677 = vmor %vm675, %vm676
        %v678 = vsel %vm677, %v669, %v674
        %v679 = vrsqrt.pop %v555
        %v680 = vmul.f32 %v679, %v555
        %v681 = vmul.f32 %v680, %v679
        %v682 = vmul.f32 0.5, %v681
        %v683 = vsub.f32 1.5, %v682
        %v684 = vmul.f32 %v679, %v683
        %vm685 = vweird.f32 %v555
        %vm686 = vweird.f32 %v679
        %vm687 = vmor %vm685, %vm686
        %v688 = vsel %vm687, %v679, %v684
        %v689 = vrsqrt.pop %v556
        %v690 = vmul.f32 %v689, %v556
        %v691 = vmul.f32 %v690, %v689
        %v692 = vmul.f32 0.5, %v691
        %v693 = vsub.f32 1.5, %v692
        %v694 = vmul.f32 %v689, %v693
        %vm695 = vweird.f32 %v556
        %vm696 = vweird.f32 %v689
        %vm697 = vmor %vm695, %vm696
        %v698 = vsel %vm697, %v689, %v694
        %v699 = vrsqrt.pop %v557
        %v700 = vmul.f32 %v699, %v557
        %v701 = vmul.f32 %v700, %v699
        %v702 = vmul.f32 0.5, %v701
        %v703 = vsub.f32 1.5, %v702
        %v704 = vmul.f32 %v699, %v703
        %vm705 = vweird.f32 %v557
        %vm706 = vweird.f32 %v699
        %vm707 = vmor %vm705, %vm706
        %v708 = vsel %vm707, %v699, %v704
        %v709 = vrsqrt.pop %v558
        %v710 = vmul.f32 %v709, %v558
        %v711 = vmul.f32 %v710, %v709
        %v712 = vmul.f32 0.5, %v711
        %v713 = vsub.f32 1.5, %v712
        %v714 = vmul.f32 %v709, %v713
        %vm715 = vweird.f32 %v558
        %vm716 = vweird.f32 %v709
        %vm717 = vmor %vm715, %vm716
        %v718 = vsel %vm717, %v709, %v714
        %v719 = vpack.c.bf16 %v578, %v568
        %v720 = vpack.c.bf16 %v598, %v588
        %v721 = vpack.c.bf16 %v618, %v608
        %v722 = vpack.c.bf16 %v638, %v628
        %v723 = vpack.c.bf16 %v658, %v648
        %v724 = vpack.c.bf16 %v678, %v668
        %v725 = vpack.c.bf16 %v698, %v688
        %v726 = vpack.c.bf16 %v718, %v708
        %v727 = vld [vmem:[%s3] sm:$0x3]
        %vm728 = vcmask 31744
        %v730 = vsel %vm728, %v719, 0
        %v733 = vsel %vm728, %v720, 0
        %v736 = vsel %vm728, %v721, 0
        %v739 = vsel %vm728, %v722, 0
        %v742 = vsel %vm728, %v723, 0
        %v745 = vsel %vm728, %v724, 0
        %v748 = vsel %vm728, %v725, 0
        %v751 = vsel %vm728, %v726, 0
        %vm753 = vcmask 1041408
        %v755 = vsel %vm753, %v727, 0
        %757 = vmatpush.bf16.msra.mxu0 0
        %758 = vmatpush.bf16.msra.mxu0 0
        %759 = vmatpush.bf16.msra.mxu0 0
        %760 = vmatpush.bf16.msra.mxu0 0
        %761 = vmatpush.bf16.msra.mxu0 0
        %762 = vmatpush.bf16.msra.mxu0 0
        %763 = vmatpush.bf16.msra.mxu0 0
        %764 = vmatpush.bf16.msra.mxu0 %v755
        %765 = vmatmul.bf16.gmra.mxu0 %v730
        %v766 = vpop.f32.mrf.mxu0
        %v767 = vadd.f32 0.0, %v766
        %v768 = vpop.f32.mrf.mxu0
        %v769 = vadd.f32 0.0, %v768
        %770 = vmatmul.bf16.gmra.mxu0 %v733
        %v771 = vpop.f32.mrf.mxu0
        %v772 = vadd.f32 0.0, %v771
        %v773 = vpop.f32.mrf.mxu0
        %v774 = vadd.f32 0.0, %v773
        %775 = vmatmul.bf16.gmra.mxu0 %v736
        %v776 = vpop.f32.mrf.mxu0
        %v777 = vadd.f32 0.0, %v776
        %v778 = vpop.f32.mrf.mxu0
        %v779 = vadd.f32 0.0, %v778
        %780 = vmatmul.bf16.gmra.mxu0 %v739
        %v781 = vpop.f32.mrf.mxu0
        %v782 = vadd.f32 0.0, %v781
        %v783 = vpop.f32.mrf.mxu0
        %v784 = vadd.f32 0.0, %v783
        %785 = vmatmul.bf16.gmra.mxu0 %v742
        %v786 = vpop.f32.mrf.mxu0
        %v787 = vadd.f32 0.0, %v786
        %v788 = vpop.f32.mrf.mxu0
        %v789 = vadd.f32 0.0, %v788
        %790 = vmatmul.bf16.gmra.mxu0 %v745
        %v791 = vpop.f32.mrf.mxu0
        %v792 = vadd.f32 0.0, %v791
        %v793 = vpop.f32.mrf.mxu0
        %v794 = vadd.f32 0.0, %v793
        %795 = vmatmul.bf16.gmra.mxu0 %v748
        %v796 = vpop.f32.mrf.mxu0
        %v797 = vadd.f32 0.0, %v796
        %v798 = vpop.f32.mrf.mxu0
        %v799 = vadd.f32 0.0, %v798
        %800 = vmatmul.bf16.gmra.mxu0 %v751
        %v801 = vpop.f32.mrf.mxu0
        %v802 = vadd.f32 0.0, %v801
        %v803 = vpop.f32.mrf.mxu0
        %v804 = vadd.f32 0.0, %v803
        %805 = vdwg.mxu0
        %v806 = vmul.f32 %v351, %v767
        %v807 = vmul.f32 %v353, %v769
        %v808 = vmul.f32 %v356, %v772
        %v809 = vmul.f32 %v358, %v774
        %v810 = vmul.f32 %v361, %v777
        %v811 = vmul.f32 %v363, %v779
        %v812 = vmul.f32 %v366, %v782
        %v813 = vmul.f32 %v368, %v784
        %v814 = vmul.f32 %v371, %v787
        %v815 = vmul.f32 %v373, %v789
        %v816 = vmul.f32 %v376, %v792
        %v817 = vmul.f32 %v378, %v794
        %v818 = vmul.f32 %v381, %v797
        %v819 = vmul.f32 %v383, %v799
        %v820 = vmul.f32 %v386, %v802
        %v821 = vmul.f32 %v388, %v804
        %v822 = vld [vmem:[%s4] sm:$0x1]
        %v824 = vperm.slane %v822, 0
        %v826 = vadd.f32 %v806, %v824
        %v827 = vadd.f32 %v807, %v824
        %v828 = vadd.f32 %v808, %v824
        %v829 = vadd.f32 %v809, %v824
        %v830 = vadd.f32 %v810, %v824
        %v831 = vadd.f32 %v811, %v824
        %v832 = vadd.f32 %v812, %v824
        %v833 = vadd.f32 %v813, %v824
        %v834 = vadd.f32 %v814, %v824
        %v835 = vadd.f32 %v815, %v824
        %v836 = vadd.f32 %v816, %v824
        %v837 = vadd.f32 %v817, %v824
        %v838 = vadd.f32 %v818, %v824
        %v839 = vadd.f32 %v819, %v824
        %v840 = vadd.f32 %v820, %v824
        %v841 = vadd.f32 %v821, %v824
        %v842 = vpack.c.bf16 %v826, %v826
        %v843 = vpack.c.bf16 %v827, %v827
        %v844 = vpack.c.bf16 %v828, %v828
        %v845 = vpack.c.bf16 %v829, %v829
        %v846 = vpack.c.bf16 %v830, %v830
        %v847 = vpack.c.bf16 %v831, %v831
        %v848 = vpack.c.bf16 %v832, %v832
        %v849 = vpack.c.bf16 %v833, %v833
        %v850 = vpack.c.bf16 %v834, %v834
        %v851 = vpack.c.bf16 %v835, %v835
        %v852 = vpack.c.bf16 %v836, %v836
        %v853 = vpack.c.bf16 %v837, %v837
        %v854 = vpack.c.bf16 %v838, %v838
        %v855 = vpack.c.bf16 %v839, %v839
        %v856 = vpack.c.bf16 %v840, %v840
        %v857 = vpack.c.bf16 %v841, %v841
        %858 = vst [vmem:[%s232] sm:$0xf] %v842
        %859 = vst [vmem:[%s232 + $0x4] sm:$0xf] %v843
        %860 = vst [vmem:[%s232 + $0x8] sm:$0xf] %v844
        %861 = vst [vmem:[%s232 + $0xc] sm:$0xf] %v845
        %862 = vst [vmem:[%s232 + $0x10] sm:$0xf] %v846
        %863 = vst [vmem:[%s232 + $0x14] sm:$0xf] %v847
        %864 = vst [vmem:[%s232 + $0x18] sm:$0xf] %v848
        %865 = vst [vmem:[%s232 + $0x1c] sm:$0xf] %v849
        %866 = vst [vmem:[%s232 + $0x20] sm:$0xf] %v850
        %867 = vst [vmem:[%s232 + $0x24] sm:$0xf] %v851
        %868 = vst [vmem:[%s232 + $0x28] sm:$0xf] %v852
        %869 = vst [vmem:[%s232 + $0x2c] sm:$0xf] %v853
        %870 = vst [vmem:[%s232 + $0x30] sm:$0xf] %v854
        %871 = vst [vmem:[%s232 + $0x34] sm:$0xf] %v855
        %872 = vst [vmem:[%s232 + $0x38] sm:$0xf] %v856
        %873 = vst [vmem:[%s232 + $0x3c] sm:$0xf] %v857
        %s874 = sand.u32 %s151, 1
        %s875 = scalar_lea.sflag [#allocation3], %s874
        %s876 = sand.u32 %s151, 1
        %s877 = smul.addr %s876, 64
        %s878 = scalar_lea.vmem [#allocation2], %s877
        // Predicated region
        $region41: #{tpu_custom_call.1} parent=39 // pred_check
          %p879 = pneg %p161
        $region42: #{tpu_custom_call.1} parent=39 // pred_check_branch
          %881 = sbr.rel (%p879) target = $region44
        $region43: #{tpu_custom_call.1} parent=39 // pred_region
          %s882 = smul.u32 16, %s23
          %884 = vsyncadd %s875, 0
          %s885 = smul.addr %s882, 4
          %s886 = sadd.s32 %s24, %s885
          %s887 = smul.addr %s886, 4
          %s888 = scalar_lea.hbm %s5, %s887
          %s889 = sshll.u32 %s878, 4
          %s890 = int_to_ptr.vmem [resolvable:$true] %s889
          %s891 = sshll.u32 %s888, 4
          %s892 = int_to_ptr.hbm [resolvable:$true] %s891
          %897 = dma.vmem_to_hbm [thread:$0]  %s890, 1024, %s892, %s875, 64, 256, 4
        $region44: #{tpu_custom_call.1} parent=39 // pred_fallthru
          _
      $region40: #{tpu_custom_call.1} parent=5 // pred_fallthru
        _
      %p898 = scmp.le.s32.totalorder 2, %s14
      // Predicated region
      $region45: #{tpu_custom_call.1} parent=5 // pred_check
        %p899 = pneg %p898
      $region46: #{tpu_custom_call.1} parent=5 // pred_check_branch
        %901 = sbr.rel (%p899) target = $region48
      $region47: #{tpu_custom_call.1} parent=5 // pred_region
        %s902 = ssub.s32 %s14, 2
        // Predicated region
        $region49: #{tpu_custom_call.1} parent=47 // pred_check
          %p903 = pneg %p167
        $region50: #{tpu_custom_call.1} parent=47 // pred_check_branch
          %905 = sbr.rel (%p903) target = $region52
        $region51: #{tpu_custom_call.1} parent=47 // pred_region
          %s906 = sand.u32 %s152, 1
          %s907 = scalar_lea.sflag [#allocation3], %s906
          %s908 = sand.u32 %s152, 1
          %s909 = smul.addr %s908, 64
          %s910 = scalar_lea.vmem [#allocation2], %s909
          %912 = dma.done %s907, 1024
        $region52: #{tpu_custom_call.1} parent=47 // pred_fallthru
          _
      $region48: #{tpu_custom_call.1} parent=5 // pred_fallthru
        _
    $region6: #{tpu_custom_call.1} parent=1 // loop_footer
      %s18 = sadd.s32 1, %s14
    $region7: #{tpu_custom_call.1} parent=1 // loop_footer_branch
      %13 = sbr.rel target = $region3
    $region8: #{tpu_custom_call.1} parent=1 // loop_exit
      _
    %913 = vsyncpa [#allocation3], 1
    %s914 = scalar_lea.sflag [#allocation3], 1
    %915 = vsyncpa %s914, 1

</llo_original>
